<compile_context>
chip_gen: v5e
topology: v5e:2x2
jax: 0.10.0
libtpu: 0.0.40
codegen_flags: <defaults>
</compile_context>

<pallas_src>
import jax
import jax.numpy as jnp
import numpy as np
from jax.experimental import pallas as pl
from jax.experimental.pallas import tpu as pltpu


def _scatter_kernel(blk_a_ref, blk_b_ref, cnt_ref,
                    iota_ref, keys_a_ref, keys_b_ref, vf_a_ref, vf_b_ref,
                    o_ref):
    """One grid step = one (batch b, pixel tile p) output tile.

    blk_a_ref / blk_b_ref / cnt_ref : (B*P_TILES,) int32 SMEM (scalar
        prefetch) - first / last sorted-voxel block overlapping the tile and
        the tile's voxel count.
    iota_ref  : (1, TP) int32   - lane iota, DMA'd once (constant index_map).
    keys_*    : (K_BLK, 1) int32 - fused keys of voxel block A / B.
    vf_*      : (C, K_BLK)       - pre-transposed features of block A / B.
    o_ref     : (1, C, TP)       - output canvas tile.
    """
    b = pl.program_id(0)
    p = pl.program_id(1)
    t = b * pl.num_programs(1) + p
    tile_p = o_ref.shape[-1]

    count = cnt_ref[t]

    @pl.when(count == 0)
    def _():
        # Sparse canvas: no pillar lands in this tile.
        o_ref[...] = jnp.zeros_like(o_ref)

    @pl.when(count > 0)
    def _():
        # Absolute fused key of every pixel (lane) in this tile.
        cols = iota_ref[...] + t * tile_p                            # (1, TP)
        # One-hot scatter matrix for block A: voxel i -> pixel j iff keys hit.
        onehot_a = (keys_a_ref[...] == cols).astype(vf_a_ref.dtype)  # (K, TP)
        # (C, K) @ (K, TP) -> (C, TP) on the MXU, f32 accumulate.
        o_ref[0] = jnp.dot(vf_a_ref[...], onehot_a,
                           preferred_element_type=jnp.float32
                           ).astype(o_ref.dtype)

        # Second dot only when the tile's sorted voxel range straddles a
        # K_BLK boundary; otherwise block B == block A and is skipped.
        @pl.when(blk_b_ref[t] != blk_a_ref[t])
        def _():
            onehot_b = (keys_b_ref[...] == cols).astype(vf_b_ref.dtype)
            o_ref[0] = o_ref[0] + jnp.dot(
                vf_b_ref[...], onehot_b,
                preferred_element_type=jnp.float32).astype(o_ref.dtype)


def pillar_scatter_batch(voxel_features, coors, batch_size, ny, nx,
                         tile_p=256, bf16_compute=False):
    """forward_batch: voxel_features (N, C), coors (N, 4) -> (B, C, ny, nx)."""
    n, c = voxel_features.shape
    out_dtype = voxel_features.dtype
    compute_dtype = jnp.bfloat16 if bf16_compute else out_dtype

    num_pixels = ny * nx
    p_pad = pl.cdiv(num_pixels, tile_p) * tile_p
    p_tiles = p_pad // tile_p
    k_blk = tile_p                     # sorted-voxel block size
    n_tiles = batch_size * p_tiles

    # Fused key: batch * padded-pixel-count + flat pixel index.  Out-of-range
    # batch ids (e.g. padding rows) get a sentinel that never matches a tile.
    batch_ids = coors[:, 0].astype(jnp.int32)
    flat_idx = (coors[:, 2] * nx + coors[:, 3]).astype(jnp.int32)
    sentinel = jnp.int32(batch_size * p_pad)
    keys = jnp.where((batch_ids >= 0) & (batch_ids < batch_size),
                     batch_ids * p_pad + flat_idx, sentinel)

    # Sort voxels by key so every pixel tile maps to a contiguous voxel range.
    # TODO(synk): argsort / gather / searchsorted run as plain XLA ops ahead
    # of the kernel and can dominate end-to-end time for very large N; reuse
    # them across ops that share `coors` if possible.
    order = jnp.argsort(keys)
    keys_sorted = keys[order]
    vf_sorted = voxel_features[order].astype(compute_dtype)

    # Pad the voxel axis so block indices blk_a and blk_a + 1 always exist.
    n_pad = (pl.cdiv(max(n, 1), k_blk) + 2) * k_blk
    pad = n_pad - n
    keys_sorted = jnp.pad(keys_sorted, (0, pad), constant_values=sentinel)
    vf_sorted = jnp.pad(vf_sorted, ((0, pad), (0, 0)))

    # Per-tile sorted range -> first block, last block, count (SMEM prefetch).
    tile_lo = jnp.arange(n_tiles, dtype=jnp.int32) * tile_p
    starts = jnp.searchsorted(keys_sorted, tile_lo,
                              side='left').astype(jnp.int32)
    ends = jnp.searchsorted(keys_sorted, tile_lo + tile_p,
                            side='left').astype(jnp.int32)
    counts = (ends - starts).astype(jnp.int32)
    blk_a = (starts // k_blk).astype(jnp.int32)
    blk_b = jnp.where(counts > 0, (ends - 1) // k_blk, blk_a).astype(jnp.int32)

    keys_2d = keys_sorted.reshape(n_pad, 1)
    vf_t = vf_sorted.T                          # (C, n_pad): one XLA transpose
    lane_iota = jax.lax.broadcasted_iota(jnp.int32, (1, tile_p), 1)

    itemsize = jnp.dtype(compute_dtype).itemsize
    flops = 2 * n_tiles * c * k_blk * tile_p
    bytes_accessed = (n_tiles * (k_blk * 4 + c * k_blk * itemsize)
                      + batch_size * c * p_pad * jnp.dtype(out_dtype).itemsize)

    out_flat = pl.pallas_call(
        _scatter_kernel,
        out_shape=jax.ShapeDtypeStruct((batch_size, c, p_pad), out_dtype),
        grid_spec=pltpu.PrefetchScalarGridSpec(
            num_scalar_prefetch=3,
            grid=(batch_size, p_tiles),
            in_specs=[
                # Lane iota: grid-invariant, DMA'd once.
                pl.BlockSpec((1, tile_p), lambda b, p, ba, bb, cnt: (0, 0)),
                # Keys of the tile's first sorted-voxel block (A) ...
                pl.BlockSpec((k_blk, 1),
                             lambda b, p, ba, bb, cnt: (ba[b * p_tiles + p], 0)),
                # ... and of the (possibly identical) straddle block (B).
                pl.BlockSpec((k_blk, 1),
                             lambda b, p, ba, bb, cnt: (bb[b * p_tiles + p], 0)),
                # Matching (C, K_BLK) slabs of pre-transposed features.
                pl.BlockSpec((c, k_blk),
                             lambda b, p, ba, bb, cnt: (0, ba[b * p_tiles + p])),
                pl.BlockSpec((c, k_blk),
                             lambda b, p, ba, bb, cnt: (0, bb[b * p_tiles + p])),
            ],
            out_specs=pl.BlockSpec((1, c, tile_p),
                                   lambda b, p, ba, bb, cnt: (b, 0, p)),
        ),
        compiler_params=pltpu.CompilerParams(
            dimension_semantics=("parallel", "parallel")),
        cost_estimate=pl.CostEstimate(flops=flops, transcendentals=0,
                                      bytes_accessed=bytes_accessed),
    )(blk_a, blk_b, counts, lane_iota, keys_2d, keys_2d, vf_t, vf_t)

    return out_flat[:, :, :num_pixels].reshape(batch_size, c, ny, nx)


def pillar_scatter_single(voxel_features, coors, ny, nx, tile_p=256,
                          bf16_compute=False):
    """forward_single: ignores coors[:, 0], output shape (1, C, ny, nx)."""
    coors0 = coors.at[:, 0].set(0)
    return pillar_scatter_batch(voxel_features, coors0, 1, ny, nx,
                                tile_p=tile_p, bf16_compute=bf16_compute)


def _reference_scatter(voxel_features, coors, batch_size, ny, nx):
    """NumPy reference mirroring the PyTorch forward_batch exactly."""
    vf = np.asarray(voxel_features)
    co = np.asarray(coors)
    c = vf.shape[1]
    out = np.zeros((batch_size, c, ny * nx), vf.dtype)
    for b in range(batch_size):
        m = co[:, 0] == b
        idx = co[m, 2] * nx + co[m, 3]
        out[b][:, idx] = vf[m].T
    return out.reshape(batch_size, c, ny, nx)


def _make_inputs(key, batch_size, in_channels, ny, nx, voxels_per_sample):
    """Unique pixel locations per sample (matches real pillar semantics)."""
    ks = jax.random.split(key, batch_size + 1)
    n_voxels = batch_size * voxels_per_sample
    voxel_features = jax.random.normal(ks[0], (n_voxels, in_channels),
                                       dtype=jnp.float32)
    coors_list = []
    for b in range(batch_size):
        perm = jax.random.permutation(ks[b + 1], ny * nx)[:voxels_per_sample]
        y = perm // nx
        x = perm % nx
        bcol = jnp.full_like(y, b)
        zcol = jnp.zeros_like(y)
        coors_list.append(jnp.stack([bcol, zcol, y, x], axis=1))
    coors = jnp.concatenate(coors_list, axis=0).astype(jnp.int32)
    return voxel_features, coors


if __name__ == "__main__":
    in_channels = 4
    batch_size = 2
    key = jax.random.PRNGKey(0)
    k1, k2, k3 = jax.random.split(key, 3)

    # Case 1: 16x16 canvas, tile_p=128 -> 2 pixel tiles / sample, exercises
    # multi-tile bucketing.
    ny1, nx1, vps1 = 16, 16, 20
    vf1, co1 = _make_inputs(k1, batch_size, in_channels, ny1, nx1, vps1)
    out1 = jax.block_until_ready(
        pillar_scatter_batch(vf1, co1, batch_size, ny1, nx1, tile_p=128))
    ref1 = _reference_scatter(vf1, co1, batch_size, ny1, nx1)
    np.testing.assert_allclose(np.asarray(out1), ref1, rtol=1e-5, atol=1e-5)

    # Case 2: 12x20 canvas (240 pixels, not a multiple of tile_p=256) ->
    # exercises the padded-and-sliced canvas path.
    ny2, nx2, vps2 = 12, 20, 30
    vf2, co2 = _make_inputs(k2, batch_size, in_channels, ny2, nx2, vps2)
    out2 = jax.block_until_ready(
        pillar_scatter_batch(vf2, co2, batch_size, ny2, nx2, tile_p=256))
    ref2 = _reference_scatter(vf2, co2, batch_size, ny2, nx2)
    np.testing.assert_allclose(np.asarray(out2), ref2, rtol=1e-5, atol=1e-5)

    # Case 3: deterministic straddle + empty-tile coverage.
    #   256-pixel canvas, tile_p=128, 100 voxels/sample at pixels 0..99:
    #   sample 1's first tile straddles the 128-voxel sorted-block boundary
    #   and two tiles are completely empty (exercises both pl.when branches).
    ny3, nx3, vps3 = 16, 16, 100
    flat3 = jnp.arange(vps3, dtype=jnp.int32)
    y3, x3 = flat3 // nx3, flat3 % nx3
    coors3 = jnp.concatenate(
        [jnp.stack([jnp.full_like(y3, b), jnp.zeros_like(y3), y3, x3], axis=1)
         for b in range(batch_size)], axis=0).astype(jnp.int32)
    vf3 = jax.random.normal(k3, (batch_size * vps3, in_channels),
                            dtype=jnp.float32)
    out3 = jax.block_until_ready(
        pillar_scatter_batch(vf3, coors3, batch_size, ny3, nx3, tile_p=128))
    ref3 = _reference_scatter(vf3, coors3, batch_size, ny3, nx3)
    np.testing.assert_allclose(np.asarray(out3), ref3, rtol=1e-5, atol=1e-5)

    # Case 4: bf16 compute path (bf16 features / one-hot, f32 accumulate) —
    # native MXU dtype on v6e/v7x; only feature rounding differs.
    out4 = jax.block_until_ready(
        pillar_scatter_batch(vf1, co1, batch_size, ny1, nx1, tile_p=128,
                             bf16_compute=True))
    np.testing.assert_allclose(np.asarray(out4), ref1, rtol=2e-2, atol=2e-2)

    # Case 5: forward_single path (single sample, batch column ignored).
    vf_s = vf1[:vps1]
    co_s = co1[:vps1]
    out_s = jax.block_until_ready(
        pillar_scatter_single(vf_s, co_s, ny1, nx1))
    ref_s = _reference_scatter(vf_s, co_s.at[:, 0].set(0), 1, ny1, nx1)
    assert out_s.shape == (1, in_channels, ny1, nx1)
    np.testing.assert_allclose(np.asarray(out_s), ref_s, rtol=1e-5, atol=1e-5)

    print("KERNEL_OK")
</pallas_src>

<mosaic_0001>
module attributes {stable_mosaic.version = 11 : i64} {
  func.func @_scatter_kernel(%arg0: i32, %arg1: i32, %arg2: memref<4xi32, #tpu.memory_space<smem>>, %arg3: memref<4xi32, #tpu.memory_space<smem>>, %arg4: memref<4xi32, #tpu.memory_space<smem>>, %arg5: memref<1x128xi32, #tpu.memory_space<vmem>>, %arg6: memref<128x1xi32, #tpu.memory_space<vmem>>, %arg7: memref<128x1xi32, #tpu.memory_space<vmem>>, %arg8: memref<4x128xf32, #tpu.memory_space<vmem>>, %arg9: memref<4x128xf32, #tpu.memory_space<vmem>>, %arg10: memref<1x4x128xf32, #tpu.memory_space<vmem>>) attributes {dimension_semantics = [#tpu.dimension_semantics<parallel>, #tpu.dimension_semantics<parallel>], iteration_bounds = array<i64: 2, 2>, scalar_prefetch = 3 : i64, scratch_operands = 0 : i64, tpu.core_type = #tpu.core_type<tc>, window_params = [{pipeline_mode = #tpu.pipeline_mode<synchronous>, transform_indices = @transform_0, window_bounds = array<i64: 1, 128>}, {transform_indices = @transform_1, window_bounds = array<i64: 128, 1>}, {transform_indices = @transform_2, window_bounds = array<i64: 128, 1>}, {transform_indices = @transform_3, window_bounds = array<i64: 4, 128>}, {transform_indices = @transform_4, window_bounds = array<i64: 4, 128>}, {transform_indices = @transform_5, window_bounds = array<i64: 1, 4, 128>}]} {
    %c2_i32 = arith.constant 2 : i32
    %0 = arith.muli %arg0, %c2_i32 : i32
    %1 = arith.addi %0, %arg1 : i32
    %2 = arith.index_cast %1 : i32 to index
    %3 = memref.load %arg4[%2] : memref<4xi32, #tpu.memory_space<smem>>
    %c0_i32 = arith.constant 0 : i32
    %4 = arith.cmpi eq, %3, %c0_i32 : i32
    %5 = arith.extui %4 : i1 to i32
    %c0_i32_0 = arith.constant 0 : i32
    %6 = arith.cmpi ne, %5, %c0_i32_0 : i32
    scf.if %6 {
      %cst = arith.constant 0.000000e+00 : f32
      %10 = vector.broadcast %cst : f32 to vector<1x4x128xf32>
      %c0 = arith.constant 0 : index
      %c0_3 = arith.constant 0 : index
      %c0_4 = arith.constant 0 : index
      %11 = vector.load %arg10[%c0, %c0_3, %c0_4] : memref<1x4x128xf32, #tpu.memory_space<vmem>>, vector<1x4x128xf32>
      tpu.vector_store %arg10[%c0, %c0_3, %c0_4], %10 {strides = array<i32>} : memref<1x4x128xf32, #tpu.memory_space<vmem>>, vector<1x4x128xf32>,
    } else {
    }
    %c0_i32_1 = arith.constant 0 : i32
    %7 = arith.cmpi sgt, %3, %c0_i32_1 : i32
    %8 = arith.extui %7 : i1 to i32
    %c0_i32_2 = arith.constant 0 : i32
    %9 = arith.cmpi ne, %8, %c0_i32_2 : i32
    scf.if %9 {
      %c0 = arith.constant 0 : index
      %c0_3 = arith.constant 0 : index
      %10 = vector.load %arg5[%c0, %c0_3] : memref<1x128xi32, #tpu.memory_space<vmem>>, vector<1x128xi32>
      %c128_i32 = arith.constant 128 : i32
      %11 = arith.muli %1, %c128_i32 : i32
      %12 = vector.broadcast %11 : i32 to vector<1x128xi32>
      %13 = arith.addi %10, %12 : vector<1x128xi32>
      %c0_4 = arith.constant 0 : index
      %c0_5 = arith.constant 0 : index
      %14 = vector.load %arg6[%c0_4, %c0_5] : memref<128x1xi32, #tpu.memory_space<vmem>>, vector<128x1xi32>
      %15 = vector.broadcast %14 : vector<128x1xi32> to vector<128x128xi32>
      %16 = vector.broadcast %13 : vector<1x128xi32> to vector<128x128xi32>
      %17 = arith.cmpi eq, %15, %16 : vector<128x128xi32>
      %18 = arith.extui %17 : vector<128x128xi1> to vector<128x128xi32>
      %19 = arith.sitofp %18 : vector<128x128xi32> to vector<128x128xf32>
      %c0_6 = arith.constant 0 : index
      %c0_7 = arith.constant 0 : index
      %20 = vector.load %arg8[%c0_6, %c0_7] : memref<4x128xf32, #tpu.memory_space<vmem>>, vector<4x128xf32>
      %cst = arith.constant dense<0.000000e+00> : vector<4x128xf32>
      %21 = tpu.matmul %20, %19, %cst {dimension_numbers = #tpu.dot_dimension_numbers<[1], [0], [0], [1], [0, 0, 1, 1], [], []>} : vector<4x128xf32>, vector<128x128xf32>, vector<4x128xf32> -> vector<4x128xf32>
      %c0_8 = arith.constant 0 : index
      %c0_9 = arith.constant 0 : index
      %c0_10 = arith.constant 0 : index
      %22 = vector.load %arg10[%c0_8, %c0_9, %c0_10] : memref<1x4x128xf32, #tpu.memory_space<vmem>>, vector<1x4x128xf32>
      %23 = vector.shape_cast %22 : vector<1x4x128xf32> to vector<4x128xf32>
      %24 = vector.shape_cast %21 : vector<4x128xf32> to vector<1x4x128xf32>
      tpu.vector_store %arg10[%c0_8, %c0_9, %c0_10], %24 {strides = array<i32>} : memref<1x4x128xf32, #tpu.memory_space<vmem>>, vector<1x4x128xf32>,
      %25 = arith.index_cast %1 : i32 to index
      %26 = memref.load %arg3[%25] : memref<4xi32, #tpu.memory_space<smem>>
      %27 = arith.index_cast %1 : i32 to index
      %28 = memref.load %arg2[%27] : memref<4xi32, #tpu.memory_space<smem>>
      %29 = arith.cmpi ne, %26, %28 : i32
      %30 = arith.extui %29 : i1 to i32
      %c0_i32_11 = arith.constant 0 : i32
      %31 = arith.cmpi ne, %30, %c0_i32_11 : i32
      scf.if %31 {
        %c0_12 = arith.constant 0 : index
        %c0_13 = arith.constant 0 : index
        %32 = vector.load %arg7[%c0_12, %c0_13] : memref<128x1xi32, #tpu.memory_space<vmem>>, vector<128x1xi32>
        %33 = vector.broadcast %32 : vector<128x1xi32> to vector<128x128xi32>
        %34 = vector.broadcast %13 : vector<1x128xi32> to vector<128x128xi32>
        %35 = arith.cmpi eq, %33, %34 : vector<128x128xi32>
        %36 = arith.extui %35 : vector<128x128xi1> to vector<128x128xi32>
        %37 = arith.sitofp %36 : vector<128x128xi32> to vector<128x128xf32>
        %c0_14 = arith.constant 0 : index
        %c0_15 = arith.constant 0 : index
        %c0_16 = arith.constant 0 : index
        %38 = vector.load %arg10[%c0_14, %c0_15, %c0_16] : memref<1x4x128xf32, #tpu.memory_space<vmem>>, vector<1x4x128xf32>
        %39 = vector.shape_cast %38 : vector<1x4x128xf32> to vector<4x128xf32>
        %c0_17 = arith.constant 0 : index
        %c0_18 = arith.constant 0 : index
        %40 = vector.load %arg9[%c0_17, %c0_18] : memref<4x128xf32, #tpu.memory_space<vmem>>, vector<4x128xf32>
        %cst_19 = arith.constant dense<0.000000e+00> : vector<4x128xf32>
        %41 = tpu.matmul %40, %37, %cst_19 {dimension_numbers = #tpu.dot_dimension_numbers<[1], [0], [0], [1], [0, 0, 1, 1], [], []>} : vector<4x128xf32>, vector<128x128xf32>, vector<4x128xf32> -> vector<4x128xf32>
        %42 = arith.addf %39, %41 : vector<4x128xf32>
        %c0_20 = arith.constant 0 : index
        %c0_21 = arith.constant 0 : index
        %c0_22 = arith.constant 0 : index
        %43 = vector.load %arg10[%c0_20, %c0_21, %c0_22] : memref<1x4x128xf32, #tpu.memory_space<vmem>>, vector<1x4x128xf32>
        %44 = vector.shape_cast %43 : vector<1x4x128xf32> to vector<4x128xf32>
        %45 = vector.shape_cast %42 : vector<4x128xf32> to vector<1x4x128xf32>
        tpu.vector_store %arg10[%c0_20, %c0_21, %c0_22], %45 {strides = array<i32>} : memref<1x4x128xf32, #tpu.memory_space<vmem>>, vector<1x4x128xf32>,
      } else {
      }
    } else {
    }
    return
  }
  func.func @transform_0(%arg0: i32, %arg1: i32, %arg2: memref<4xi32, #tpu.memory_space<smem>>, %arg3: memref<4xi32, #tpu.memory_space<smem>>, %arg4: memref<4xi32, #tpu.memory_space<smem>>) -> (i32, i32) {
    %c0_i32 = arith.constant 0 : i32
    %c0_i32_0 = arith.constant 0 : i32
    %c0_i32_1 = arith.constant 0 : i32
    return %c0_i32, %c0_i32_0 : i32, i32
  }
  func.func @transform_1(%arg0: i32, %arg1: i32, %arg2: memref<4xi32, #tpu.memory_space<smem>>, %arg3: memref<4xi32, #tpu.memory_space<smem>>, %arg4: memref<4xi32, #tpu.memory_space<smem>>) -> (i32, i32) {
    %c2_i32 = arith.constant 2 : i32
    %0 = arith.muli %arg0, %c2_i32 : i32
    %1 = arith.addi %0, %arg1 : i32
    %2 = arith.index_cast %1 : i32 to index
    %3 = memref.load %arg2[%2] : memref<4xi32, #tpu.memory_space<smem>>
    %c0_i32 = arith.constant 0 : i32
    %c0_i32_0 = arith.constant 0 : i32
    return %3, %c0_i32 : i32, i32
  }
  func.func @transform_2(%arg0: i32, %arg1: i32, %arg2: memref<4xi32, #tpu.memory_space<smem>>, %arg3: memref<4xi32, #tpu.memory_space<smem>>, %arg4: memref<4xi32, #tpu.memory_space<smem>>) -> (i32, i32) {
    %c2_i32 = arith.constant 2 : i32
    %0 = arith.muli %arg0, %c2_i32 : i32
    %1 = arith.addi %0, %arg1 : i32
    %2 = arith.index_cast %1 : i32 to index
    %3 = memref.load %arg3[%2] : memref<4xi32, #tpu.memory_space<smem>>
    %c0_i32 = arith.constant 0 : i32
    %c0_i32_0 = arith.constant 0 : i32
    return %3, %c0_i32 : i32, i32
  }
  func.func @transform_3(%arg0: i32, %arg1: i32, %arg2: memref<4xi32, #tpu.memory_space<smem>>, %arg3: memref<4xi32, #tpu.memory_space<smem>>, %arg4: memref<4xi32, #tpu.memory_space<smem>>) -> (i32, i32) {
    %c2_i32 = arith.constant 2 : i32
    %0 = arith.muli %arg0, %c2_i32 : i32
    %1 = arith.addi %0, %arg1 : i32
    %2 = arith.index_cast %1 : i32 to index
    %3 = memref.load %arg2[%2] : memref<4xi32, #tpu.memory_space<smem>>
    %c0_i32 = arith.constant 0 : i32
    %c0_i32_0 = arith.constant 0 : i32
    return %c0_i32, %3 : i32, i32
  }
  func.func @transform_4(%arg0: i32, %arg1: i32, %arg2: memref<4xi32, #tpu.memory_space<smem>>, %arg3: memref<4xi32, #tpu.memory_space<smem>>, %arg4: memref<4xi32, #tpu.memory_space<smem>>) -> (i32, i32) {
    %c2_i32 = arith.constant 2 : i32
    %0 = arith.muli %arg0, %c2_i32 : i32
    %1 = arith.addi %0, %arg1 : i32
    %2 = arith.index_cast %1 : i32 to index
    %3 = memref.load %arg3[%2] : memref<4xi32, #tpu.memory_space<smem>>
    %c0_i32 = arith.constant 0 : i32
    %c0_i32_0 = arith.constant 0 : i32
    return %c0_i32, %3 : i32, i32
  }
  func.func @transform_5(%arg0: i32, %arg1: i32, %arg2: memref<4xi32, #tpu.memory_space<smem>>, %arg3: memref<4xi32, #tpu.memory_space<smem>>, %arg4: memref<4xi32, #tpu.memory_space<smem>>) -> (i32, i32, i32) {
    %c0_i32 = arith.constant 0 : i32
    %c0_i32_0 = arith.constant 0 : i32
    return %arg0, %c0_i32, %arg1 : i32, i32, i32
  }
}

</mosaic_0001>

<llo_original>
// kernel: tpu_custom_call.1
$region0: #{tpu_custom_call.1}
  #allocation0 [shape = 'u32[]', space=smem, size = 0x4, offset = 0x4, fixed_abs, tag = 'smem constant byte address 0x4 - core index']
  #allocation1 [shape = 'u32[72,128]{1,0:T(1,128)}', space=vmem, size = 0x9000, scoped, tag = 'internal scratch']
  #allocation2 [shape = 's32[1]{0}', space=sflag, size = 0x4, scoped, tag = 'scoped memory for tpu_custom_call.1']
  #allocation3 [shape = 'u8[512]{0}', space=smem, size = 0x200, scoped, tag = 'prefetched SMEM operand 0']
  #allocation4 [shape = 'u8[512]{0}', space=smem, size = 0x200, scoped, tag = 'prefetched SMEM operand 1']
  #allocation5 [shape = 'u8[512]{0}', space=smem, size = 0x200, scoped, tag = 'prefetched SMEM operand 2']
  %s0 = inlined_call_operand.vmem [shape: s32[4], index: 0, kind: input, shape index: {}]
  %s1 = inlined_call_operand.vmem [shape: s32[4], index: 1, kind: input, shape index: {}]
  %s2 = inlined_call_operand.vmem [shape: s32[4], index: 2, kind: input, shape index: {}]
  %s3 = inlined_call_operand.vmem [shape: s32[1,128], index: 3, kind: input, shape index: {}]
  %s4 = inlined_call_operand.vmem [shape: s32[384,1], index: 4, kind: input, shape index: {}]
  %s5 = inlined_call_operand.vmem [shape: s32[384,1], index: 5, kind: input, shape index: {}]
  %s6 = inlined_call_operand.vmem [shape: f32[4,384], index: 6, kind: input, shape index: {}]
  %s7 = inlined_call_operand.vmem [shape: f32[4,384], index: 7, kind: input, shape index: {}]
  %s8 = inlined_call_operand.hbm [shape: f32[2,4,256], index: 8, kind: output, shape index: {}]
  %s9 = sld [smem:[#allocation0]]
  $region65: #{tpu_custom_call.1} parent=0
    _
  %s11 = ssub.s32 1, %s9
  %s12 = scalar_select 0, %s11, %s9
  %s14 = sshll.u32 %s0, 4
  %s15 = int_to_ptr.vmem [resolvable:$true] %s14
  %17 = dma.vmem_to_smem %s15, 16, [#allocation3], [#allocation2]
  %s19 = sshll.u32 %s1, 4
  %s20 = int_to_ptr.vmem [resolvable:$true] %s19
  %22 = dma.vmem_to_smem %s20, 16, [#allocation4], [#allocation2]
  %s24 = sshll.u32 %s2, 4
  %s25 = int_to_ptr.vmem [resolvable:$true] %s24
  %27 = dma.vmem_to_smem %s25, 16, [#allocation5], [#allocation2]
  %29 = dma.done [#allocation2], 48
  %30 = sfence
  $region1: #{tpu_custom_call.1} parent=0
    #allocation6 [shape = 'u8[4096]{0}', space=vmem, size = 0x1000, scoped, tag = 'output window, operand 0']
    #allocation7 [shape = 's32[2]{0}', space=sflag, size = 0x8, scoped, tag = 'scoped memory for tpu_custom_call.1']
    %31 = vsyncpa [#allocation7], 0
    %s32 = scalar_lea.sflag [#allocation7], 1
    %33 = vsyncpa %s32, 0
    loop: start=0, step=1, limit=6
    $region2: #{tpu_custom_call.1} parent=1 // loop_pre_header
      _
    $region3: #{tpu_custom_call.1} parent=1 // loop_header
      %s35 = sphi 0, %s39
      %p36 = scmp.ge.s32.totalorder %s35, 6
      %s42 = sphi 0, %s54
      %s43 = sphi 0, %s50
      %s44 = sphi 0, %s42
      %s45 = sphi 0, %s43
      %s46 = sphi 0, %s44
      %s47 = sphi 0, %s45
      %s55 = sphi 0, %s55
      %s57 = sphi 0, %s55
      %s58 = sphi 0, %s57
      %s72 = sphi 0, %s58
      %s84 = sphi 0, %s86
      %s87 = sphi 0, %s84
      %s88 = sphi 0, %s87
      %s104 = sphi 0, %s88
      %s116 = sphi 0, %s118
      %s119 = sphi 0, %s116
      %s120 = sphi 0, %s119
      %s136 = sphi 0, %s120
      %s148 = sphi 0, %s150
      %s151 = sphi 0, %s148
      %s152 = sphi 0, %s151
      %s168 = sphi 0, %s152
      %s180 = sphi 0, %s182
      %s183 = sphi 0, %s180
      %s184 = sphi 0, %s183
      %s200 = sphi 0, %s184
      %s208 = sphi 0, %s210
      %s211 = sphi 0, %s208
      %s212 = sphi 0, %s211
      %s228 = sphi 0, %s212
    $region4: #{tpu_custom_call.1} parent=1 // loop_header_branch
      %38 = sbr.rel (%p36) target = $region8
    $region5: #{tpu_custom_call.1} parent=1 // loop_body
      %s40 = ssub.s32 %s35, 1
      %s41 = ssub.s32 %s35, 2
      %s48 = sadd.s32 1, %s43
      %p49 = scmp.ge.s32.totalorder %s48, 2
      %s50 = scalar_select %p49, 0, %s48
      %s51 = sadd.s32 1, %s42
      %s52 = scalar_select %p49, %s51, %s42
      %p53 = scmp.ge.s32.totalorder %s52, 2
      %s54 = scalar_select %p53, 0, %s52
      %s56 = sadd.s32 %s55, 1
      %p59 = scmp.eq.s32.totalorder %s35, 3
      %p60 = scmp.ne.s32.totalorder %s55, %s57
      %p61 = scmp.eq.s32.totalorder %s35, 0
      %p62 = por %p60, %p61
      %p63 = scmp.ne.s32.totalorder %s55, %s57
      %p64 = scmp.eq.s32.totalorder %s40, 3
      %p65 = por %p63, %p64
      %p66 = scmp.ne.s32.totalorder %s57, %s58
      %p67 = scmp.eq.s32.totalorder %s40, 0
      %p68 = por %p66, %p67
      %p69 = scmp.ne.s32.totalorder %s57, %s58
      %p70 = scmp.eq.s32.totalorder %s41, 3
      %p71 = por %p69, %p70
      %p73 = scmp.ne.s32.totalorder %s58, %s72
      %p74 = scmp.eq.s32.totalorder %s41, 0
      %p75 = por %p73, %p74
      %s76 = smul.u32 %s42, 2
      %s77 = sadd.s32 %s76, %s43
      %s78 = sld [smem:[#allocation3 + %s77]]
      %s79 = smul.u32 %s54, 2
      %s80 = sadd.s32 %s79, %s50
      %s81 = sld [smem:[#allocation3 + %s80]]
      %s82 = ssub.s32 %s78, %s81
      %p83 = scmp.eq.s32.totalorder %s82, 0
      %s85 = sadd.s32 %s84, 1
      %s86 = scalar_select %p83, %s84, %s85
      %p89 = pneg %p83
      %p90 = scmp.eq.s32.totalorder %s35, 3
      %p91 = por %p89, %p90
      %p92 = scmp.ne.s32.totalorder %s84, %s87
      %p93 = scmp.eq.s32.totalorder %s35, 0
      %p94 = por %p92, %p93
      %p95 = scmp.ne.s32.totalorder %s84, %s87
      %p96 = scmp.eq.s32.totalorder %s40, 3
      %p97 = por %p95, %p96
      %p98 = scmp.ne.s32.totalorder %s87, %s88
      %p99 = scmp.eq.s32.totalorder %s40, 0
      %p100 = por %p98, %p99
      %p101 = scmp.ne.s32.totalorder %s87, %s88
      %p102 = scmp.eq.s32.totalorder %s41, 3
      %p103 = por %p101, %p102
      %p105 = scmp.ne.s32.totalorder %s88, %s104
      %p106 = scmp.eq.s32.totalorder %s41, 0
      %p107 = por %p105, %p106
      %s108 = smul.u32 %s42, 2
      %s109 = sadd.s32 %s108, %s43
      %s110 = sld [smem:[#allocation4 + %s109]]
      %s111 = smul.u32 %s54, 2
      %s112 = sadd.s32 %s111, %s50
      %s113 = sld [smem:[#allocation4 + %s112]]
      %s114 = ssub.s32 %s110, %s113
      %p115 = scmp.eq.s32.totalorder %s114, 0
      %s117 = sadd.s32 %s116, 1
      %s118 = scalar_select %p115, %s116, %s117
      %p121 = pneg %p115
      %p122 = scmp.eq.s32.totalorder %s35, 3
      %p123 = por %p121, %p122
      %p124 = scmp.ne.s32.totalorder %s116, %s119
      %p125 = scmp.eq.s32.totalorder %s35, 0
      %p126 = por %p124, %p125
      %p127 = scmp.ne.s32.totalorder %s116, %s119
      %p128 = scmp.eq.s32.totalorder %s40, 3
      %p129 = por %p127, %p128
      %p130 = scmp.ne.s32.totalorder %s119, %s120
      %p131 = scmp.eq.s32.totalorder %s40, 0
      %p132 = por %p130, %p131
      %p133 = scmp.ne.s32.totalorder %s119, %s120
      %p134 = scmp.eq.s32.totalorder %s41, 3
      %p135 = por %p133, %p134
      %p137 = scmp.ne.s32.totalorder %s120, %s136
      %p138 = scmp.eq.s32.totalorder %s41, 0
      %p139 = por %p137, %p138
      %s140 = smul.u32 %s42, 2
      %s141 = sadd.s32 %s140, %s43
      %s142 = sld [smem:[#allocation3 + %s141]]
      %s143 = smul.u32 %s54, 2
      %s144 = sadd.s32 %s143, %s50
      %s145 = sld [smem:[#allocation3 + %s144]]
      %s146 = ssub.s32 %s142, %s145
      %p147 = scmp.eq.s32.totalorder %s146, 0
      %s149 = sadd.s32 %s148, 1
      %s150 = scalar_select %p147, %s148, %s149
      %p153 = pneg %p147
      %p154 = scmp.eq.s32.totalorder %s35, 3
      %p155 = por %p153, %p154
      %p156 = scmp.ne.s32.totalorder %s148, %s151
      %p157 = scmp.eq.s32.totalorder %s35, 0
      %p158 = por %p156, %p157
      %p159 = scmp.ne.s32.totalorder %s148, %s151
      %p160 = scmp.eq.s32.totalorder %s40, 3
      %p161 = por %p159, %p160
      %p162 = scmp.ne.s32.totalorder %s151, %s152
      %p163 = scmp.eq.s32.totalorder %s40, 0
      %p164 = por %p162, %p163
      %p165 = scmp.ne.s32.totalorder %s151, %s152
      %p166 = scmp.eq.s32.totalorder %s41, 3
      %p167 = por %p165, %p166
      %p169 = scmp.ne.s32.totalorder %s152, %s168
      %p170 = scmp.eq.s32.totalorder %s41, 0
      %p171 = por %p169, %p170
      %s172 = smul.u32 %s42, 2
      %s173 = sadd.s32 %s172, %s43
      %s174 = sld [smem:[#allocation4 + %s173]]
      %s175 = smul.u32 %s54, 2
      %s176 = sadd.s32 %s175, %s50
      %s177 = sld [smem:[#allocation4 + %s176]]
      %s178 = ssub.s32 %s174, %s177
      %p179 = scmp.eq.s32.totalorder %s178, 0
      %s181 = sadd.s32 %s180, 1
      %s182 = scalar_select %p179, %s180, %s181
      %p185 = pneg %p179
      %p186 = scmp.eq.s32.totalorder %s35, 3
      %p187 = por %p185, %p186
      %p188 = scmp.ne.s32.totalorder %s180, %s183
      %p189 = scmp.eq.s32.totalorder %s35, 0
      %p190 = por %p188, %p189
      %p191 = scmp.ne.s32.totalorder %s180, %s183
      %p192 = scmp.eq.s32.totalorder %s40, 3
      %p193 = por %p191, %p192
      %p194 = scmp.ne.s32.totalorder %s183, %s184
      %p195 = scmp.eq.s32.totalorder %s40, 0
      %p196 = por %p194, %p195
      %p197 = scmp.ne.s32.totalorder %s183, %s184
      %p198 = scmp.eq.s32.totalorder %s41, 3
      %p199 = por %p197, %p198
      %p201 = scmp.ne.s32.totalorder %s184, %s200
      %p202 = scmp.eq.s32.totalorder %s41, 0
      %p203 = por %p201, %p202
      %s204 = ssub.s32 %s42, %s54
      %s205 = ssub.s32 %s43, %s50
      %s206 = sor.u32 %s204, %s205
      %p207 = scmp.eq.s32.totalorder %s206, 0
      %s209 = sadd.s32 %s208, 1
      %s210 = scalar_select %p207, %s208, %s209
      %p213 = pneg %p207
      %p214 = scmp.eq.s32.totalorder %s35, 3
      %p215 = por %p213, %p214
      %p216 = scmp.ne.s32.totalorder %s208, %s211
      %p217 = scmp.eq.s32.totalorder %s35, 0
      %p218 = por %p216, %p217
      %p219 = scmp.ne.s32.totalorder %s208, %s211
      %p220 = scmp.eq.s32.totalorder %s40, 3
      %p221 = por %p219, %p220
      %p222 = scmp.ne.s32.totalorder %s211, %s212
      %p223 = scmp.eq.s32.totalorder %s40, 0
      %p224 = por %p222, %p223
      %p225 = scmp.ne.s32.totalorder %s211, %s212
      %p226 = scmp.eq.s32.totalorder %s41, 3
      %p227 = por %p225, %p226
      %p229 = scmp.ne.s32.totalorder %s212, %s228
      %p230 = scmp.eq.s32.totalorder %s41, 0
      %p231 = por %p229, %p230
      %p232 = scmp.le.s32.totalorder 1, %s35
      %p233 = scmp.lt.s32.totalorder %s35, 5
      %p234 = pnand %p232, %p233
      %p235 = pneg %p234
      // Predicated region
      $region9: #{tpu_custom_call.1} parent=5 // pred_check
        _
      $region10: #{tpu_custom_call.1} parent=5 // pred_check_branch
        %237 = sbr.rel (%p234) target = $region12
      $region11: #{tpu_custom_call.1} parent=5 // pred_region
        %s238 = ssub.s32 %s35, 1
        // Predicated region
        $region13: #{tpu_custom_call.1} parent=11 // pred_check
          %p239 = pneg %p68
        $region14: #{tpu_custom_call.1} parent=11 // pred_check_branch
          %241 = sbr.rel (%p239) target = $region16
        $region15: #{tpu_custom_call.1} parent=11 // pred_region
          _
        $region16: #{tpu_custom_call.1} parent=11 // pred_fallthru
          _
      $region12: #{tpu_custom_call.1} parent=5 // pred_fallthru
        _
      %p242 = scmp.lt.s32.totalorder %s35, 4
      // Predicated region
      $region17: #{tpu_custom_call.1} parent=5 // pred_check
        %p243 = pneg %p242
      $region18: #{tpu_custom_call.1} parent=5 // pred_check_branch
        %245 = sbr.rel (%p243) target = $region20
      $region19: #{tpu_custom_call.1} parent=5 // pred_region
        // Predicated region
        $region21: #{tpu_custom_call.1} parent=19 // pred_check
          %p246 = pneg %p94
        $region22: #{tpu_custom_call.1} parent=19 // pred_check_branch
          %248 = sbr.rel (%p246) target = $region24
        $region23: #{tpu_custom_call.1} parent=19 // pred_region
          %s249 = smul.u32 %s42, 2
          %s250 = sadd.s32 %s249, %s43
          %s251 = sld [smem:[#allocation3 + %s250]]
          %s252 = smul.u32 16, %s251
          %p253 = scmp.lt.s32.totalorder %s252, 47
          %s254 = scalar_select %p253, %s252, 47
          %s255 = smul.addr %s254, 8
          %s256 = scalar_lea.vmem %s4, %s255
          %s257 = smul.u32 %s42, 2
          %s258 = sadd.s32 %s257, %s43
          %s259 = sld [smem:[#allocation3 + %s258]]
          %s260 = smul.u32 16, %s259
        $region24: #{tpu_custom_call.1} parent=19 // pred_fallthru
          _
        // Predicated region
        $region25: #{tpu_custom_call.1} parent=19 // pred_check
          %p261 = pneg %p126
        $region26: #{tpu_custom_call.1} parent=19 // pred_check_branch
          %263 = sbr.rel (%p261) target = $region28
        $region27: #{tpu_custom_call.1} parent=19 // pred_region
          %s264 = smul.u32 %s42, 2
          %s265 = sadd.s32 %s264, %s43
          %s266 = sld [smem:[#allocation4 + %s265]]
          %s267 = smul.u32 16, %s266
          %p268 = scmp.lt.s32.totalorder %s267, 47
          %s269 = scalar_select %p268, %s267, 47
          %s270 = smul.addr %s269, 8
          %s271 = scalar_lea.vmem %s5, %s270
          %s272 = smul.u32 %s42, 2
          %s273 = sadd.s32 %s272, %s43
          %s274 = sld [smem:[#allocation4 + %s273]]
          %s275 = smul.u32 16, %s274
        $region28: #{tpu_custom_call.1} parent=19 // pred_fallthru
          _
        // Predicated region
        $region29: #{tpu_custom_call.1} parent=19 // pred_check
          %p276 = pneg %p158
        $region30: #{tpu_custom_call.1} parent=19 // pred_check_branch
          %278 = sbr.rel (%p276) target = $region32
        $region31: #{tpu_custom_call.1} parent=19 // pred_region
          %s279 = smul.u32 %s42, 2
          %s280 = sadd.s32 %s279, %s43
          %s281 = sld [smem:[#allocation3 + %s280]]
          %p282 = scmp.lt.s32.totalorder %s281, 2
          %s283 = scalar_select %p282, %s281, 2
          %s284 = smul.addr %s283, 4
          %s285 = scalar_lea.vmem %s6, %s284
          %s286 = smul.u32 %s42, 2
          %s287 = sadd.s32 %s286, %s43
          %s288 = sld [smem:[#allocation3 + %s287]]
        $region32: #{tpu_custom_call.1} parent=19 // pred_fallthru
          _
        // Predicated region
        $region33: #{tpu_custom_call.1} parent=19 // pred_check
          %p289 = pneg %p190
        $region34: #{tpu_custom_call.1} parent=19 // pred_check_branch
          %291 = sbr.rel (%p289) target = $region36
        $region35: #{tpu_custom_call.1} parent=19 // pred_region
          %s292 = smul.u32 %s42, 2
          %s293 = sadd.s32 %s292, %s43
          %s294 = sld [smem:[#allocation4 + %s293]]
          %p295 = scmp.lt.s32.totalorder %s294, 2
          %s296 = scalar_select %p295, %s294, 2
          %s297 = smul.addr %s296, 4
          %s298 = scalar_lea.vmem %s7, %s297
          %s299 = smul.u32 %s42, 2
          %s300 = sadd.s32 %s299, %s43
          %s301 = sld [smem:[#allocation4 + %s300]]
        $region36: #{tpu_custom_call.1} parent=19 // pred_fallthru
          _
      $region20: #{tpu_custom_call.1} parent=5 // pred_fallthru
        _
      %p302 = scmp.le.s32.totalorder 1, %s35
      %p303 = scmp.lt.s32.totalorder %s35, 5
      %p304 = pnand %p302, %p303
      %p305 = pneg %p304
      // Predicated region
      $region37: #{tpu_custom_call.1} parent=5 // pred_check
        _
      $region38: #{tpu_custom_call.1} parent=5 // pred_check_branch
        %307 = sbr.rel (%p304) target = $region40
      $region39: #{tpu_custom_call.1} parent=5 // pred_region
        %s308 = ssub.s32 %s35, 1
        %p309 = pneg %p68
        %p310 = pneg %p65
        %s311 = smul.u32 %s44, 2
        %s312 = sadd.s32 %s311, %s45
        %s313 = sld [smem:[#allocation3 + %s312]]
        %s314 = smul.u32 16, %s313
        %p315 = scmp.lt.s32.totalorder %s314, 47
        %s316 = scalar_select %p315, %s314, 47
        %s317 = smul.addr %s316, 8
        %s318 = scalar_lea.vmem %s4, %s317
        %p319 = pneg %p100
        %p320 = pneg %p97
        %s321 = smul.u32 %s44, 2
        %s322 = sadd.s32 %s321, %s45
        %s323 = sld [smem:[#allocation4 + %s322]]
        %s324 = smul.u32 16, %s323
        %p325 = scmp.lt.s32.totalorder %s324, 47
        %s326 = scalar_select %p325, %s324, 47
        %s327 = smul.addr %s326, 8
        %s328 = scalar_lea.vmem %s5, %s327
        %p329 = pneg %p132
        %p330 = pneg %p129
        %s331 = smul.u32 %s44, 2
        %s332 = sadd.s32 %s331, %s45
        %s333 = sld [smem:[#allocation3 + %s332]]
        %p334 = scmp.lt.s32.totalorder %s333, 2
        %s335 = scalar_select %p334, %s333, 2
        %s336 = smul.addr %s335, 4
        %s337 = scalar_lea.vmem %s6, %s336
        %p338 = pneg %p164
        %p339 = pneg %p161
        %s340 = smul.u32 %s44, 2
        %s341 = sadd.s32 %s340, %s45
        %s342 = sld [smem:[#allocation4 + %s341]]
        %p343 = scmp.lt.s32.totalorder %s342, 2
        %s344 = scalar_select %p343, %s342, 2
        %s345 = smul.addr %s344, 4
        %s346 = scalar_lea.vmem %s7, %s345
        %p347 = pneg %p196
        %p348 = pneg %p193
        %p349 = pneg %p224
        %p350 = pneg %p221
        %s351 = sand.u32 %s211, 1
        %s352 = scalar_lea.sflag [#allocation7], %s351
        %s353 = sand.u32 %s211, 1
        %s354 = smul.addr %s353, 4
        %s355 = scalar_lea.vmem [#allocation6], %s354
        %s356 = smul.u32 %s44, 2
        %s357 = sadd.s32 %s356, %s45
        %s358 = sld [smem:[#allocation3 + %s357]]
        %s359 = smul.u32 16, %s358
        %p360 = scmp.lt.s32.totalorder %s359, 47
        %s361 = scalar_select %p360, %s359, 47
        %s362 = smul.addr %s361, 8
        %s363 = scalar_lea.vmem %s4, %s362
        %s364 = smul.u32 %s44, 2
        %s365 = sadd.s32 %s364, %s45
        %s366 = sld [smem:[#allocation3 + %s365]]
        %s367 = smul.u32 16, %s366
        %s368 = smul.u32 %s44, 2
        %s369 = sadd.s32 %s368, %s45
        %s370 = sld [smem:[#allocation4 + %s369]]
        %s371 = smul.u32 16, %s370
        %p372 = scmp.lt.s32.totalorder %s371, 47
        %s373 = scalar_select %p372, %s371, 47
        %s374 = smul.addr %s373, 8
        %s375 = scalar_lea.vmem %s5, %s374
        %s376 = smul.u32 %s44, 2
        %s377 = sadd.s32 %s376, %s45
        %s378 = sld [smem:[#allocation4 + %s377]]
        %s379 = smul.u32 16, %s378
        %s380 = smul.u32 %s44, 2
        %s381 = sadd.s32 %s380, %s45
        %s382 = sld [smem:[#allocation3 + %s381]]
        %p383 = scmp.lt.s32.totalorder %s382, 2
        %s384 = scalar_select %p383, %s382, 2
        %s385 = smul.addr %s384, 4
        %s386 = scalar_lea.vmem %s6, %s385
        %s387 = smul.u32 %s44, 2
        %s388 = sadd.s32 %s387, %s45
        %s389 = sld [smem:[#allocation3 + %s388]]
        %s390 = smul.u32 %s44, 2
        %s391 = sadd.s32 %s390, %s45
        %s392 = sld [smem:[#allocation4 + %s391]]
        %p393 = scmp.lt.s32.totalorder %s392, 2
        %s394 = scalar_select %p393, %s392, 2
        %s395 = smul.addr %s394, 4
        %s396 = scalar_lea.vmem %s7, %s395
        %s397 = smul.u32 %s44, 2
        %s398 = sadd.s32 %s397, %s45
        %s399 = sld [smem:[#allocation4 + %s398]]
        %s400 = smul.u32 %s44, 2
        %s401 = sadd.s32 %s400, %s45
        %s402 = sld [smem:[#allocation5 + %s401]]
        %p403 = scmp.eq.s32.totalorder %s402, 0
        // Predicated region
        $region41: #{tpu_custom_call.1} parent=39 // pred_check
          %p404 = pneg %p403
        $region42: #{tpu_custom_call.1} parent=39 // pred_check_branch
          %406 = sbr.rel (%p404) target = $region44
        $region43: #{tpu_custom_call.1} parent=39 // pred_region
          %407 = vst [vmem:[%s355] sm:$0xf] 0.0
        $region44: #{tpu_custom_call.1} parent=39 // pred_fallthru
          _
        %p408 = scmp.gt.s32.totalorder %s402, 0
        // Predicated region
        $region45: #{tpu_custom_call.1} parent=39 // pred_check
          %p409 = pneg %p408
        $region46: #{tpu_custom_call.1} parent=39 // pred_check_branch
          %411 = sbr.rel (%p409) target = $region48
        $region47: #{tpu_custom_call.1} parent=39 // pred_region
          %v412 = vld [vmem:[%s3] sm:$0x1]
          %s413 = smul.u32 %s401, 128
          %v414 = vstv %s413
          %v415 = vadd.s32 %v412, %v414
          %v416 = vld [vmem:[%s363] sm:$0xff]
          %v417 = vld [vmem:[%s363 + $0x8] sm:$0xff]
          %v418 = vld [vmem:[%s363 + $0x10] sm:$0xff]
          %v419 = vld [vmem:[%s363 + $0x18] sm:$0xff]
          %v420 = vld [vmem:[%s363 + $0x20] sm:$0xff]
          %v421 = vld [vmem:[%s363 + $0x28] sm:$0xff]
          %v422 = vld [vmem:[%s363 + $0x30] sm:$0xff]
          %v423 = vld [vmem:[%s363 + $0x38] sm:$0xff]
          %v424 = vld [vmem:[%s363 + $0x40] sm:$0xff]
          %v425 = vld [vmem:[%s363 + $0x48] sm:$0xff]
          %v426 = vld [vmem:[%s363 + $0x50] sm:$0xff]
          %v427 = vld [vmem:[%s363 + $0x58] sm:$0xff]
          %v428 = vld [vmem:[%s363 + $0x60] sm:$0xff]
          %v429 = vld [vmem:[%s363 + $0x68] sm:$0xff]
          %v430 = vld [vmem:[%s363 + $0x70] sm:$0xff]
          %v431 = vld [vmem:[%s363 + $0x78] sm:$0xff]
          %432 = vset.pattern.permute.xlu0 0
          %433 = vperm.xlu0 %432, %v416
          %v434 = vpop.permute.xlu0 %433
          %435 = vset.pattern.permute.xlu0 0
          %436 = vperm.xlu0 %435, %v417
          %v437 = vpop.permute.xlu0 %436
          %438 = vset.pattern.permute.xlu0 0
          %439 = vperm.xlu0 %438, %v418
          %v440 = vpop.permute.xlu0 %439
          %441 = vset.pattern.permute.xlu0 0
          %442 = vperm.xlu0 %441, %v419
          %v443 = vpop.permute.xlu0 %442
          %444 = vset.pattern.permute.xlu0 0
          %445 = vperm.xlu0 %444, %v420
          %v446 = vpop.permute.xlu0 %445
          %447 = vset.pattern.permute.xlu0 0
          %448 = vperm.xlu0 %447, %v421
          %v449 = vpop.permute.xlu0 %448
          %450 = vset.pattern.permute.xlu0 0
          %451 = vperm.xlu0 %450, %v422
          %v452 = vpop.permute.xlu0 %451
          %453 = vset.pattern.permute.xlu0 0
          %454 = vperm.xlu0 %453, %v423
          %v455 = vpop.permute.xlu0 %454
          %456 = vset.pattern.permute.xlu0 0
          %457 = vperm.xlu0 %456, %v424
          %v458 = vpop.permute.xlu0 %457
          %459 = vset.pattern.permute.xlu0 0
          %460 = vperm.xlu0 %459, %v425
          %v461 = vpop.permute.xlu0 %460
          %462 = vset.pattern.permute.xlu0 0
          %463 = vperm.xlu0 %462, %v426
          %v464 = vpop.permute.xlu0 %463
          %465 = vset.pattern.permute.xlu0 0
          %466 = vperm.xlu0 %465, %v427
          %v467 = vpop.permute.xlu0 %466
          %468 = vset.pattern.permute.xlu0 0
          %469 = vperm.xlu0 %468, %v428
          %v470 = vpop.permute.xlu0 %469
          %471 = vset.pattern.permute.xlu0 0
          %472 = vperm.xlu0 %471, %v429
          %v473 = vpop.permute.xlu0 %472
          %474 = vset.pattern.permute.xlu0 0
          %475 = vperm.xlu0 %474, %v430
          %v476 = vpop.permute.xlu0 %475
          %477 = vset.pattern.permute.xlu0 0
          %478 = vperm.xlu0 %477, %v431
          %v479 = vpop.permute.xlu0 %478
          %v480 = vperm.slane %v415, 0
          %vm481 = vcmp.eq.s32.totalorder %v434, %v480
          %vm482 = vcmp.eq.s32.totalorder %v437, %v480
          %vm483 = vcmp.eq.s32.totalorder %v440, %v480
          %vm484 = vcmp.eq.s32.totalorder %v443, %v480
          %vm485 = vcmp.eq.s32.totalorder %v446, %v480
          %vm486 = vcmp.eq.s32.totalorder %v449, %v480
          %vm487 = vcmp.eq.s32.totalorder %v452, %v480
          %vm488 = vcmp.eq.s32.totalorder %v455, %v480
          %vm489 = vcmp.eq.s32.totalorder %v458, %v480
          %vm490 = vcmp.eq.s32.totalorder %v461, %v480
          %vm491 = vcmp.eq.s32.totalorder %v464, %v480
          %vm492 = vcmp.eq.s32.totalorder %v467, %v480
          %vm493 = vcmp.eq.s32.totalorder %v470, %v480
          %vm494 = vcmp.eq.s32.totalorder %v473, %v480
          %vm495 = vcmp.eq.s32.totalorder %v476, %v480
          %vm496 = vcmp.eq.s32.totalorder %v479, %v480
          %v497 = vsel %vm481, 1, 0
          %v498 = vsel %vm482, 1, 0
          %v499 = vsel %vm483, 1, 0
          %v500 = vsel %vm484, 1, 0
          %v501 = vsel %vm485, 1, 0
          %v502 = vsel %vm486, 1, 0
          %v503 = vsel %vm487, 1, 0
          %v504 = vsel %vm488, 1, 0
          %v505 = vsel %vm489, 1, 0
          %v506 = vsel %vm490, 1, 0
          %v507 = vsel %vm491, 1, 0
          %v508 = vsel %vm492, 1, 0
          %v509 = vsel %vm493, 1, 0
          %v510 = vsel %vm494, 1, 0
          %v511 = vsel %vm495, 1, 0
          %v512 = vsel %vm496, 1, 0
          %v513 = vcvt.s32.f32 %v497
          %v514 = vcvt.s32.f32 %v498
          %v515 = vcvt.s32.f32 %v499
          %v516 = vcvt.s32.f32 %v500
          %v517 = vcvt.s32.f32 %v501
          %v518 = vcvt.s32.f32 %v502
          %v519 = vcvt.s32.f32 %v503
          %v520 = vcvt.s32.f32 %v504
          %v521 = vcvt.s32.f32 %v505
          %v522 = vcvt.s32.f32 %v506
          %v523 = vcvt.s32.f32 %v507
          %v524 = vcvt.s32.f32 %v508
          %v525 = vcvt.s32.f32 %v509
          %v526 = vcvt.s32.f32 %v510
          %v527 = vcvt.s32.f32 %v511
          %v528 = vcvt.s32.f32 %v512
          %v529 = vld [vmem:[%s386] sm:$0xf]
          %530 = vmatpush.msra.mxu0 %v528
          %531 = vmatpush.msra.mxu0 %v527
          %532 = vmatpush.msra.mxu0 %v526
          %533 = vmatpush.msra.mxu0 %v525
          %534 = vmatpush.msra.mxu0 %v524
          %535 = vmatpush.msra.mxu0 %v523
          %536 = vmatpush.msra.mxu0 %v522
          %537 = vmatpush.msra.mxu0 %v521
          %538 = vmatpush.msra.mxu0 %v520
          %539 = vmatpush.msra.mxu0 %v519
          %540 = vmatpush.msra.mxu0 %v518
          %541 = vmatpush.msra.mxu0 %v517
          %542 = vmatpush.msra.mxu0 %v516
          %543 = vmatpush.msra.mxu0 %v515
          %544 = vmatpush.msra.mxu0 %v514
          %545 = vmatpush.msra.mxu0 %v513
          %546 = vmatmul.f32.gmra.mxu0 %v529
          %v547 = vpop.f32.mrf.mxu0
          %v548 = vadd.f32 0.0, %v547
          %549 = vdwg.mxu0
          %550 = vst [vmem:[%s355] sm:$0xf] %v548
          %s551 = sld [smem:[#allocation4 + %s401]]
          %s552 = sld [smem:[#allocation3 + %s401]]
          %p553 = scmp.ne.s32.totalorder %s551, %s552
          // Predicated region
          $region49: #{tpu_custom_call.1} parent=47 // pred_check
            %p554 = pneg %p553
          $region50: #{tpu_custom_call.1} parent=47 // pred_check_branch
            %556 = sbr.rel (%p554) target = $region52
          $region51: #{tpu_custom_call.1} parent=47 // pred_region
            %v557 = vld [vmem:[%s375] sm:$0xff]
            %v558 = vld [vmem:[%s375 + $0x8] sm:$0xff]
            %v559 = vld [vmem:[%s375 + $0x10] sm:$0xff]
            %v560 = vld [vmem:[%s375 + $0x18] sm:$0xff]
            %v561 = vld [vmem:[%s375 + $0x20] sm:$0xff]
            %v562 = vld [vmem:[%s375 + $0x28] sm:$0xff]
            %v563 = vld [vmem:[%s375 + $0x30] sm:$0xff]
            %v564 = vld [vmem:[%s375 + $0x38] sm:$0xff]
            %v565 = vld [vmem:[%s375 + $0x40] sm:$0xff]
            %v566 = vld [vmem:[%s375 + $0x48] sm:$0xff]
            %v567 = vld [vmem:[%s375 + $0x50] sm:$0xff]
            %v568 = vld [vmem:[%s375 + $0x58] sm:$0xff]
            %v569 = vld [vmem:[%s375 + $0x60] sm:$0xff]
            %v570 = vld [vmem:[%s375 + $0x68] sm:$0xff]
            %v571 = vld [vmem:[%s375 + $0x70] sm:$0xff]
            %v572 = vld [vmem:[%s375 + $0x78] sm:$0xff]
            %573 = vset.pattern.permute.xlu0 0
            %574 = vperm.xlu0 %573, %v557
            %v575 = vpop.permute.xlu0 %574
            %576 = vset.pattern.permute.xlu0 0
            %577 = vperm.xlu0 %576, %v558
            %v578 = vpop.permute.xlu0 %577
            %579 = vset.pattern.permute.xlu0 0
            %580 = vperm.xlu0 %579, %v559
            %v581 = vpop.permute.xlu0 %580
            %582 = vset.pattern.permute.xlu0 0
            %583 = vperm.xlu0 %582, %v560
            %v584 = vpop.permute.xlu0 %583
            %585 = vset.pattern.permute.xlu0 0
            %586 = vperm.xlu0 %585, %v561
            %v587 = vpop.permute.xlu0 %586
            %588 = vset.pattern.permute.xlu0 0
            %589 = vperm.xlu0 %588, %v562
            %v590 = vpop.permute.xlu0 %589
            %591 = vset.pattern.permute.xlu0 0
            %592 = vperm.xlu0 %591, %v563
            %v593 = vpop.permute.xlu0 %592
            %594 = vset.pattern.permute.xlu0 0
            %595 = vperm.xlu0 %594, %v564
            %v596 = vpop.permute.xlu0 %595
            %597 = vset.pattern.permute.xlu0 0
            %598 = vperm.xlu0 %597, %v565
            %v599 = vpop.permute.xlu0 %598
            %600 = vset.pattern.permute.xlu0 0
            %601 = vperm.xlu0 %600, %v566
            %v602 = vpop.permute.xlu0 %601
            %603 = vset.pattern.permute.xlu0 0
            %604 = vperm.xlu0 %603, %v567
            %v605 = vpop.permute.xlu0 %604
            %606 = vset.pattern.permute.xlu0 0
            %607 = vperm.xlu0 %606, %v568
            %v608 = vpop.permute.xlu0 %607
            %609 = vset.pattern.permute.xlu0 0
            %610 = vperm.xlu0 %609, %v569
            %v611 = vpop.permute.xlu0 %610
            %612 = vset.pattern.permute.xlu0 0
            %613 = vperm.xlu0 %612, %v570
            %v614 = vpop.permute.xlu0 %613
            %615 = vset.pattern.permute.xlu0 0
            %616 = vperm.xlu0 %615, %v571
            %v617 = vpop.permute.xlu0 %616
            %618 = vset.pattern.permute.xlu0 0
            %619 = vperm.xlu0 %618, %v572
            %v620 = vpop.permute.xlu0 %619
            %vm621 = vcmp.eq.s32.totalorder %v575, %v480
            %vm622 = vcmp.eq.s32.totalorder %v578, %v480
            %vm623 = vcmp.eq.s32.totalorder %v581, %v480
            %vm624 = vcmp.eq.s32.totalorder %v584, %v480
            %vm625 = vcmp.eq.s32.totalorder %v587, %v480
            %vm626 = vcmp.eq.s32.totalorder %v590, %v480
            %vm627 = vcmp.eq.s32.totalorder %v593, %v480
            %vm628 = vcmp.eq.s32.totalorder %v596, %v480
            %vm629 = vcmp.eq.s32.totalorder %v599, %v480
            %vm630 = vcmp.eq.s32.totalorder %v602, %v480
            %vm631 = vcmp.eq.s32.totalorder %v605, %v480
            %vm632 = vcmp.eq.s32.totalorder %v608, %v480
            %vm633 = vcmp.eq.s32.totalorder %v611, %v480
            %vm634 = vcmp.eq.s32.totalorder %v614, %v480
            %vm635 = vcmp.eq.s32.totalorder %v617, %v480
            %vm636 = vcmp.eq.s32.totalorder %v620, %v480
            %v637 = vsel %vm621, 1, 0
            %v638 = vsel %vm622, 1, 0
            %v639 = vsel %vm623, 1, 0
            %v640 = vsel %vm624, 1, 0
            %v641 = vsel %vm625, 1, 0
            %v642 = vsel %vm626, 1, 0
            %v643 = vsel %vm627, 1, 0
            %v644 = vsel %vm628, 1, 0
            %v645 = vsel %vm629, 1, 0
            %v646 = vsel %vm630, 1, 0
            %v647 = vsel %vm631, 1, 0
            %v648 = vsel %vm632, 1, 0
            %v649 = vsel %vm633, 1, 0
            %v650 = vsel %vm634, 1, 0
            %v651 = vsel %vm635, 1, 0
            %v652 = vsel %vm636, 1, 0
            %v653 = vcvt.s32.f32 %v637
            %v654 = vcvt.s32.f32 %v638
            %v655 = vcvt.s32.f32 %v639
            %v656 = vcvt.s32.f32 %v640
            %v657 = vcvt.s32.f32 %v641
            %v658 = vcvt.s32.f32 %v642
            %v659 = vcvt.s32.f32 %v643
            %v660 = vcvt.s32.f32 %v644
            %v661 = vcvt.s32.f32 %v645
            %v662 = vcvt.s32.f32 %v646
            %v663 = vcvt.s32.f32 %v647
            %v664 = vcvt.s32.f32 %v648
            %v665 = vcvt.s32.f32 %v649
            %v666 = vcvt.s32.f32 %v650
            %v667 = vcvt.s32.f32 %v651
            %v668 = vcvt.s32.f32 %v652
            %v669 = vld [vmem:[%s355] sm:$0xf]
            %v670 = vld [vmem:[%s396] sm:$0xf]
            %671 = vmatpush.msra.mxu0 %v668
            %672 = vmatpush.msra.mxu0 %v667
            %673 = vmatpush.msra.mxu0 %v666
            %674 = vmatpush.msra.mxu0 %v665
            %675 = vmatpush.msra.mxu0 %v664
            %676 = vmatpush.msra.mxu0 %v663
            %677 = vmatpush.msra.mxu0 %v662
            %678 = vmatpush.msra.mxu0 %v661
            %679 = vmatpush.msra.mxu0 %v660
            %680 = vmatpush.msra.mxu0 %v659
            %681 = vmatpush.msra.mxu0 %v658
            %682 = vmatpush.msra.mxu0 %v657
            %683 = vmatpush.msra.mxu0 %v656
            %684 = vmatpush.msra.mxu0 %v655
            %685 = vmatpush.msra.mxu0 %v654
            %686 = vmatpush.msra.mxu0 %v653
            %687 = vmatmul.f32.gmra.mxu0 %v670
            %v688 = vpop.f32.mrf.mxu0
            %v689 = vadd.f32 0.0, %v688
            %690 = vdwg.mxu0
            %v691 = vadd.f32 %v669, %v689
            %692 = vst [vmem:[%s355] sm:$0xf] %v691
          $region52: #{tpu_custom_call.1} parent=47 // pred_fallthru
            _
        $region48: #{tpu_custom_call.1} parent=39 // pred_fallthru
          _
        %s693 = sand.u32 %s211, 1
        %s694 = scalar_lea.sflag [#allocation7], %s693
        %s695 = sand.u32 %s211, 1
        %s696 = smul.addr %s695, 4
        %s697 = scalar_lea.vmem [#allocation6], %s696
        // Predicated region
        $region53: #{tpu_custom_call.1} parent=39 // pred_check
          %p698 = pneg %p221
        $region54: #{tpu_custom_call.1} parent=39 // pred_check_branch
          %700 = sbr.rel (%p698) target = $region56
        $region55: #{tpu_custom_call.1} parent=39 // pred_region
          %702 = vsyncadd %s694, 0
          %s703 = smul.addr %s44, 2
          %s704 = sadd.s32 %s45, %s703
          %s705 = smul.addr %s704, 4
          %s706 = scalar_lea.hbm %s8, %s705
          %s708 = sshll.u32 %s697, 4
          %s709 = int_to_ptr.vmem [resolvable:$true] %s708
          %s710 = sshll.u32 %s706, 4
          %s711 = int_to_ptr.hbm [resolvable:$true] %s710
          %713 = dma.vmem_to_hbm [thread:$0]  %s709, 64, %s711, %s694
        $region56: #{tpu_custom_call.1} parent=39 // pred_fallthru
          _
      $region40: #{tpu_custom_call.1} parent=5 // pred_fallthru
        _
      %p714 = scmp.le.s32.totalorder 2, %s35
      // Predicated region
      $region57: #{tpu_custom_call.1} parent=5 // pred_check
        %p715 = pneg %p714
      $region58: #{tpu_custom_call.1} parent=5 // pred_check_branch
        %717 = sbr.rel (%p715) target = $region60
      $region59: #{tpu_custom_call.1} parent=5 // pred_region
        %s718 = ssub.s32 %s35, 2
        // Predicated region
        $region61: #{tpu_custom_call.1} parent=59 // pred_check
          %p719 = pneg %p227
        $region62: #{tpu_custom_call.1} parent=59 // pred_check_branch
          %721 = sbr.rel (%p719) target = $region64
        $region63: #{tpu_custom_call.1} parent=59 // pred_region
          %s722 = sand.u32 %s212, 1
          %s723 = scalar_lea.sflag [#allocation7], %s722
          %s724 = sand.u32 %s212, 1
          %s725 = smul.addr %s724, 4
          %s726 = scalar_lea.vmem [#allocation6], %s725
          %728 = dma.done %s723, 64
        $region64: #{tpu_custom_call.1} parent=59 // pred_fallthru
          _
      $region60: #{tpu_custom_call.1} parent=5 // pred_fallthru
        _
    $region6: #{tpu_custom_call.1} parent=1 // loop_footer
      %s39 = sadd.s32 1, %s35
    $region7: #{tpu_custom_call.1} parent=1 // loop_footer_branch
      %34 = sbr.rel target = $region3
    $region8: #{tpu_custom_call.1} parent=1 // loop_exit
      _
    %729 = vsyncpa [#allocation7], 1
    %s730 = scalar_lea.sflag [#allocation7], 1
    %731 = vsyncpa %s730, 1

</llo_original>
